<compile_context>
chip_gen: v7x
topology: tpu7x:2x2x1
jax: 0.10.0
libtpu: 0.0.40
codegen_flags: <defaults>
</compile_context>

<pallas_src>
import jax
import jax.numpy as jnp
from jax import lax
from jax.experimental import pallas as pl
from jax.experimental.pallas import tpu as pltpu

STATE_SIZE = 32
ACTION_SIZE = 8
FCS1_UNITS = 256
FC2_UNITS = 256
BATCH = 8
BN_EPS = 1e-5

# Row layout of the packed [8, 256] vector-parameter slab.
ROW_B1, ROW_GAMMA, ROW_BETA, ROW_B2, ROW_W3, ROW_B3 = 0, 1, 2, 3, 4, 5


def critic_kernel(state_ref, action_ref, w1_ref, w2s_ref, w2a_ref, vec_ref,
                  out_ref):
    x = state_ref[...].astype(jnp.float32)          # [B, 32]
    a = action_ref[...].astype(jnp.float32)         # [B, 8]

    b1 = vec_ref[ROW_B1:ROW_B1 + 1, :]               # [1, 256]
    gamma = vec_ref[ROW_GAMMA:ROW_GAMMA + 1, :]
    beta = vec_ref[ROW_BETA:ROW_BETA + 1, :]
    b2 = vec_ref[ROW_B2:ROW_B2 + 1, :]
    w3row = vec_ref[ROW_W3:ROW_W3 + 1, :]
    b3 = vec_ref[ROW_B3:ROW_B3 + 1, 0:1]              # [1, 1]

    # ---- fcs1: state @ W1 + b1 (bf16 weight up-cast in VMEM, f32 accumulate)
    w1 = w1_ref[...].astype(jnp.float32)
    h1 = jnp.dot(x, w1, preferred_element_type=jnp.float32) + b1

    # ---- BatchNorm1d (train mode: batch mean, biased variance), fused affine
    mean = jnp.mean(h1, axis=0, keepdims=True)
    ctr = h1 - mean
    var = jnp.mean(ctr * ctr, axis=0, keepdims=True)
    scale = gamma * lax.rsqrt(var + BN_EPS)           # [1, 256]
    shift = beta - mean * scale                       # [1, 256]
    xs = jnp.maximum(h1 * scale + shift, 0.0)         # ReLU

    # ---- fc2 on concat([xs, action]) == xs @ W2s + action @ W2a + b2 ----
    w2s = w2s_ref[...].astype(jnp.float32)
    w2a = w2a_ref[...].astype(jnp.float32)
    h2 = (jnp.dot(xs, w2s, preferred_element_type=jnp.float32)
          + jnp.dot(a, w2a, preferred_element_type=jnp.float32)
          + b2)
    h2 = jnp.maximum(h2, 0.0)

    # ---- fc3 -> Q: VPU multiply + lane reduce (no [256,1] MXU operand) ----
    q = jnp.sum(h2 * w3row, axis=-1, keepdims=True) + b3
    out_ref[...] = q.astype(out_ref.dtype)


def critic_forward(state, action, params):
    """state: [B, state_size], action: [B, action_size] -> [B, 1]."""
    w1, w2s, w2a, vecs = params
    B = state.shape[0]
    vmem = pl.BlockSpec(memory_space=pltpu.MemorySpace.VMEM)
    return pl.pallas_call(
        critic_kernel,
        out_shape=jax.ShapeDtypeStruct((B, 1), jnp.float32),
        in_specs=[vmem] * 6,
        out_specs=vmem,
    )(state, action, w1, w2s, w2a, vecs)


def init_params(key):
    """Mirrors the Critic's parameter shapes.

    PyTorch Linear weight is [out, in]; matmul weights are stored transposed
    [in, out] and cast to bf16 for HBM residency.  Small vectors are packed
    into one [8, 256] f32 slab (rows: b1, gamma, beta, b2, w3-row, b3)."""
    ks = jax.random.split(key, 6)

    def uniform(k, shape, lim):
        return jax.random.uniform(k, shape, jnp.float32, -lim, lim)

    lim1 = 1.0 / (STATE_SIZE ** 0.5)
    w1 = uniform(ks[0], (STATE_SIZE, FCS1_UNITS), lim1).astype(jnp.bfloat16)
    b1 = uniform(ks[1], (FCS1_UNITS,), lim1)

    gamma = jnp.ones((FCS1_UNITS,), jnp.float32)    # BatchNorm1d weight
    beta = jnp.zeros((FCS1_UNITS,), jnp.float32)    # BatchNorm1d bias

    lim2 = 1.0 / ((FCS1_UNITS + ACTION_SIZE) ** 0.5)
    w2_full = uniform(ks[2], (FCS1_UNITS + ACTION_SIZE, FC2_UNITS), lim2)
    w2s = w2_full[:FCS1_UNITS, :].astype(jnp.bfloat16)
    w2a = w2_full[FCS1_UNITS:, :].astype(jnp.bfloat16)
    b2 = uniform(ks[3], (FC2_UNITS,), lim2)

    w3 = uniform(ks[4], (FC2_UNITS,), 3e-3)          # fc3 weight as a row
    b3 = uniform(ks[5], (1,), 3e-3)
    b3_row = jnp.full((FC2_UNITS,), b3[0], jnp.float32)

    vecs = jnp.stack([b1, gamma, beta, b2, w3, b3_row], axis=0)   # [6, 256]
    vecs = jnp.pad(vecs, ((0, 2), (0, 0)))                         # [8, 256]

    return (w1, w2s, w2a, vecs)


def critic_reference(state, action, params):
    """Pure-JAX reference on the same (packed) parameters."""
    w1, w2s, w2a, vecs = params
    b1, gamma, beta, b2 = vecs[ROW_B1], vecs[ROW_GAMMA], vecs[ROW_BETA], vecs[ROW_B2]
    w3, b3 = vecs[ROW_W3], vecs[ROW_B3, 0]
    h1 = state @ w1.astype(jnp.float32) + b1
    mean = jnp.mean(h1, axis=0, keepdims=True)
    var = jnp.mean((h1 - mean) ** 2, axis=0, keepdims=True)
    xs = jnp.maximum((h1 - mean) / jnp.sqrt(var + BN_EPS) * gamma + beta, 0.0)
    h2 = jnp.maximum(xs @ w2s.astype(jnp.float32)
                     + action @ w2a.astype(jnp.float32) + b2, 0.0)
    return h2 @ w3.astype(jnp.float32)[:, None] + b3


if __name__ == "__main__":
    key = jax.random.PRNGKey(0)
    k_state, k_action, k_params = jax.random.split(key, 3)

    state = jax.random.normal(k_state, (BATCH, STATE_SIZE), jnp.float32)
    action = jax.random.normal(k_action, (BATCH, ACTION_SIZE), jnp.float32)
    params = init_params(k_params)

    out = critic_forward(state, action, params)
    out = jax.block_until_ready(out)

    ref = critic_reference(state, action, params)
    assert out.shape == (BATCH, 1), out.shape
    assert jnp.allclose(out, ref, rtol=1e-3, atol=1e-4), (out, ref)

    print("KERNEL_OK")
</pallas_src>

<mosaic_0001>
module attributes {stable_mosaic.version = 11 : i64} {
  func.func @critic_kernel(%arg0: memref<8x32xf32, #tpu.memory_space<vmem>>, %arg1: memref<8x8xf32, #tpu.memory_space<vmem>>, %arg2: memref<32x256xbf16, #tpu.memory_space<vmem>>, %arg3: memref<256x256xbf16, #tpu.memory_space<vmem>>, %arg4: memref<8x256xbf16, #tpu.memory_space<vmem>>, %arg5: memref<8x256xf32, #tpu.memory_space<vmem>>, %arg6: memref<8x1xf32, #tpu.memory_space<vmem>>) attributes {dimension_semantics = [], scalar_prefetch = 0 : i64, scratch_operands = 0 : i64, tpu.core_type = #tpu.core_type<tc>} {
    %c0 = arith.constant 0 : index
    %c0_0 = arith.constant 0 : index
    %0 = vector.load %arg0[%c0, %c0_0] : memref<8x32xf32, #tpu.memory_space<vmem>>, vector<8x32xf32>
    %c0_1 = arith.constant 0 : index
    %c0_2 = arith.constant 0 : index
    %1 = vector.load %arg1[%c0_1, %c0_2] : memref<8x8xf32, #tpu.memory_space<vmem>>, vector<8x8xf32>
    %c0_3 = arith.constant 0 : index
    %c0_4 = arith.constant 0 : index
    %2 = vector.load %arg5[%c0_3, %c0_4] : memref<8x256xf32, #tpu.memory_space<vmem>>, vector<1x256xf32>
    %c1 = arith.constant 1 : index
    %c0_5 = arith.constant 0 : index
    %3 = vector.load %arg5[%c1, %c0_5] : memref<8x256xf32, #tpu.memory_space<vmem>>, vector<1x256xf32>
    %c2 = arith.constant 2 : index
    %c0_6 = arith.constant 0 : index
    %4 = vector.load %arg5[%c2, %c0_6] : memref<8x256xf32, #tpu.memory_space<vmem>>, vector<1x256xf32>
    %c3 = arith.constant 3 : index
    %c0_7 = arith.constant 0 : index
    %5 = vector.load %arg5[%c3, %c0_7] : memref<8x256xf32, #tpu.memory_space<vmem>>, vector<1x256xf32>
    %c4 = arith.constant 4 : index
    %c0_8 = arith.constant 0 : index
    %6 = vector.load %arg5[%c4, %c0_8] : memref<8x256xf32, #tpu.memory_space<vmem>>, vector<1x256xf32>
    %c5 = arith.constant 5 : index
    %c0_9 = arith.constant 0 : index
    %7 = vector.load %arg5[%c5, %c0_9] : memref<8x256xf32, #tpu.memory_space<vmem>>, vector<1x1xf32>
    %c0_10 = arith.constant 0 : index
    %c0_11 = arith.constant 0 : index
    %8 = vector.load %arg2[%c0_10, %c0_11] : memref<32x256xbf16, #tpu.memory_space<vmem>>, vector<32x256xbf16>
    %9 = arith.extf %8 : vector<32x256xbf16> to vector<32x256xf32>
    %cst = arith.constant dense<0.000000e+00> : vector<8x256xf32>
    %10 = tpu.matmul %0, %9, %cst {dimension_numbers = #tpu.dot_dimension_numbers<[1], [0], [0], [1], [0, 0, 1, 1], [], []>} : vector<8x32xf32>, vector<32x256xf32>, vector<8x256xf32> -> vector<8x256xf32>
    %11 = vector.broadcast %2 : vector<1x256xf32> to vector<8x256xf32>
    %12 = arith.addf %10, %11 : vector<8x256xf32>
    %cst_12 = arith.constant dense<0.000000e+00> : vector<256xf32>
    %13 = vector.multi_reduction <add>, %12, %cst_12 [0] : vector<8x256xf32> to vector<256xf32>
    %14 = vector.shape_cast %13 : vector<256xf32> to vector<1x256xf32>
    %cst_13 = arith.constant 8.000000e+00 : f32
    %15 = vector.broadcast %cst_13 : f32 to vector<1x256xf32>
    %16 = arith.divf %14, %15 : vector<1x256xf32>
    %17 = vector.broadcast %16 : vector<1x256xf32> to vector<8x256xf32>
    %18 = arith.subf %12, %17 : vector<8x256xf32>
    %19 = arith.mulf %18, %18 : vector<8x256xf32>
    %cst_14 = arith.constant dense<0.000000e+00> : vector<256xf32>
    %20 = vector.multi_reduction <add>, %19, %cst_14 [0] : vector<8x256xf32> to vector<256xf32>
    %21 = vector.shape_cast %20 : vector<256xf32> to vector<1x256xf32>
    %cst_15 = arith.constant 8.000000e+00 : f32
    %22 = vector.broadcast %cst_15 : f32 to vector<1x256xf32>
    %23 = arith.divf %21, %22 : vector<1x256xf32>
    %cst_16 = arith.constant 9.99999974E-6 : f32
    %24 = vector.broadcast %cst_16 : f32 to vector<1x256xf32>
    %25 = arith.addf %23, %24 : vector<1x256xf32>
    %26 = math.rsqrt %25 : vector<1x256xf32>
    %27 = arith.mulf %3, %26 : vector<1x256xf32>
    %28 = arith.mulf %16, %27 : vector<1x256xf32>
    %29 = arith.subf %4, %28 : vector<1x256xf32>
    %30 = vector.broadcast %27 : vector<1x256xf32> to vector<8x256xf32>
    %31 = arith.mulf %12, %30 : vector<8x256xf32>
    %32 = vector.broadcast %29 : vector<1x256xf32> to vector<8x256xf32>
    %33 = arith.addf %31, %32 : vector<8x256xf32>
    %cst_17 = arith.constant 0.000000e+00 : f32
    %34 = vector.broadcast %cst_17 : f32 to vector<8x256xf32>
    %35 = arith.maximumf %33, %34 : vector<8x256xf32>
    %c0_18 = arith.constant 0 : index
    %c0_19 = arith.constant 0 : index
    %36 = vector.load %arg3[%c0_18, %c0_19] : memref<256x256xbf16, #tpu.memory_space<vmem>>, vector<256x256xbf16>
    %37 = arith.extf %36 : vector<256x256xbf16> to vector<256x256xf32>
    %c0_20 = arith.constant 0 : index
    %c0_21 = arith.constant 0 : index
    %38 = vector.load %arg4[%c0_20, %c0_21] : memref<8x256xbf16, #tpu.memory_space<vmem>>, vector<8x256xbf16>
    %39 = arith.extf %38 : vector<8x256xbf16> to vector<8x256xf32>
    %cst_22 = arith.constant dense<0.000000e+00> : vector<8x256xf32>
    %40 = tpu.matmul %35, %37, %cst_22 {dimension_numbers = #tpu.dot_dimension_numbers<[1], [0], [0], [1], [0, 0, 1, 1], [], []>} : vector<8x256xf32>, vector<256x256xf32>, vector<8x256xf32> -> vector<8x256xf32>
    %cst_23 = arith.constant dense<0.000000e+00> : vector<8x256xf32>
    %41 = tpu.matmul %1, %39, %cst_23 {dimension_numbers = #tpu.dot_dimension_numbers<[1], [0], [0], [1], [0, 0, 1, 1], [], []>} : vector<8x8xf32>, vector<8x256xf32>, vector<8x256xf32> -> vector<8x256xf32>
    %42 = arith.addf %40, %41 : vector<8x256xf32>
    %43 = vector.broadcast %5 : vector<1x256xf32> to vector<8x256xf32>
    %44 = arith.addf %42, %43 : vector<8x256xf32>
    %cst_24 = arith.constant 0.000000e+00 : f32
    %45 = vector.broadcast %cst_24 : f32 to vector<8x256xf32>
    %46 = arith.maximumf %44, %45 : vector<8x256xf32>
    %47 = vector.broadcast %6 : vector<1x256xf32> to vector<8x256xf32>
    %48 = arith.mulf %46, %47 : vector<8x256xf32>
    %cst_25 = arith.constant dense<0.000000e+00> : vector<8xf32>
    %49 = vector.multi_reduction <add>, %48, %cst_25 [1] : vector<8x256xf32> to vector<8xf32>
    %50 = vector.shape_cast %49 : vector<8xf32> to vector<8x1xf32>
    %51 = vector.broadcast %7 : vector<1x1xf32> to vector<8x1xf32>
    %52 = arith.addf %50, %51 : vector<8x1xf32>
    %c0_26 = arith.constant 0 : index
    %c0_27 = arith.constant 0 : index
    %53 = vector.load %arg6[%c0_26, %c0_27] : memref<8x1xf32, #tpu.memory_space<vmem>>, vector<8x1xf32>
    tpu.vector_store %arg6[%c0_26, %c0_27], %52 {strides = array<i32>} : memref<8x1xf32, #tpu.memory_space<vmem>>, vector<8x1xf32>,
    return
  }
}

</mosaic_0001>

<llo_original>
// kernel: tpu_custom_call.1
$region0: #{tpu_custom_call.1}
  #allocation0 [shape = 'u32[]', space=smem, size = 0x4, offset = 0x4, fixed_abs, tag = 'smem constant byte address 0x4 - core index']
  #allocation1 [shape = 'u32[144,128]{1,0:T(1,128)}', space=vmem, size = 0x12000, scoped, tag = 'internal scratch']
  %s0 = inlined_call_operand.hbm [shape: f32[8,32], index: 0, kind: input, shape index: {}]
  %s1 = inlined_call_operand.hbm [shape: f32[8,8], index: 1, kind: input, shape index: {}]
  %s2 = inlined_call_operand.hbm [shape: bf16[32,256], index: 2, kind: input, shape index: {}]
  %s3 = inlined_call_operand.hbm [shape: bf16[256,256], index: 3, kind: input, shape index: {}]
  %s4 = inlined_call_operand.hbm [shape: bf16[8,256], index: 4, kind: input, shape index: {}]
  %s5 = inlined_call_operand.vmem [shape: f32[8,256], index: 5, kind: input, shape index: {}]
  %s6 = inlined_call_operand.vmem [shape: f32[8,1], index: 6, kind: output, shape index: {}]
  %s7 = sld [smem:[#allocation0]]
  $region54: #{tpu_custom_call.1} parent=0
    _
  %s9 = ssub.s32 1, %s7
  %s10 = scalar_select 0, %s9, %s7
  $region1: #{tpu_custom_call.1} parent=0
    #allocation2 [shape = 'u8[4096]{0}', space=vmem, size = 0x1000, scoped, tag = 'input window, operand 0, single buffered']
    #allocation3 [shape = 's32[1]{0}', space=sflag, size = 0x4, scoped, tag = 'scoped memory for tpu_custom_call.1']
    #allocation4 [shape = 'u8[4096]{0}', space=vmem, size = 0x1000, scoped, tag = 'input window, operand 1, single buffered']
    #allocation5 [shape = 's32[1]{0}', space=sflag, size = 0x4, scoped, tag = 'scoped memory for tpu_custom_call.1']
    #allocation6 [shape = 'u8[16384]{0}', space=vmem, size = 0x4000, scoped, tag = 'input window, operand 2, single buffered']
    #allocation7 [shape = 'u8[131072]{0}', space=vmem, size = 0x20000, scoped, tag = 'input window, operand 3, single buffered']
    #allocation8 [shape = 's32[1]{0}', space=sflag, size = 0x4, scoped, tag = 'scoped memory for tpu_custom_call.1']
    #allocation9 [shape = 'u8[4096]{0}', space=vmem, size = 0x1000, scoped, tag = 'input window, operand 4, single buffered']
    %11 = vsyncpa [#allocation3], 0
    %12 = vsyncpa [#allocation5], 0
    %13 = vsyncpa [#allocation8], 0
    // Predicated region
    $region2: #{tpu_custom_call.1} parent=1 // pred_check
      _
    $region3: #{tpu_custom_call.1} parent=1 // pred_check_branch
      %15 = sbr.rel (0) target = $region5
    $region4: #{tpu_custom_call.1} parent=1 // pred_region
      %s17 = ssub.s32 128, 128
      %18 = vsyncadd [#allocation3], %s17
      %s20 = sshll.u32 [#allocation2], 4
      %s21 = int_to_ptr.vmem [resolvable:$true] %s20
      %23 = dma.hbm_to_vmem [thread:$0]  %s0, 128, %s21, [#allocation3]
    $region5: #{tpu_custom_call.1} parent=1 // pred_fallthru
      _
    // Predicated region
    $region6: #{tpu_custom_call.1} parent=1 // pred_check
      _
    $region7: #{tpu_custom_call.1} parent=1 // pred_check_branch
      %25 = sbr.rel (0) target = $region9
    $region8: #{tpu_custom_call.1} parent=1 // pred_region
      %s27 = ssub.s32 128, 128
      %28 = vsyncadd [#allocation5], %s27
      %s30 = sshll.u32 [#allocation4], 4
      %s31 = int_to_ptr.vmem [resolvable:$true] %s30
      %33 = dma.hbm_to_vmem [thread:$0]  %s1, 128, %s31, [#allocation5]
    $region9: #{tpu_custom_call.1} parent=1 // pred_fallthru
      _
    // Predicated region
    $region10: #{tpu_custom_call.1} parent=1 // pred_check
      _
    $region11: #{tpu_custom_call.1} parent=1 // pred_check_branch
      %35 = sbr.rel (0) target = $region13
    $region12: #{tpu_custom_call.1} parent=1 // pred_region
      %s37 = ssub.s32 512, 512
      %38 = vsyncadd [#allocation5], %s37
      %s39 = sshll.u32 [#allocation6], 4
      %s40 = int_to_ptr.vmem [resolvable:$true] %s39
      %45 = dma.hbm_to_vmem [thread:$0]  %s2, 512, %s40, [#allocation5], 128, 128, 8
    $region13: #{tpu_custom_call.1} parent=1 // pred_fallthru
      _
    // Predicated region
    $region14: #{tpu_custom_call.1} parent=1 // pred_check
      _
    $region15: #{tpu_custom_call.1} parent=1 // pred_check_branch
      %47 = sbr.rel (0) target = $region17
    $region16: #{tpu_custom_call.1} parent=1 // pred_region
      %s49 = ssub.s32 4096, 4096
      %50 = vsyncadd [#allocation8], %s49
      %s51 = sshll.u32 [#allocation7], 4
      %s52 = int_to_ptr.vmem [resolvable:$true] %s51
      %57 = dma.hbm_to_vmem [thread:$0]  %s3, 4096, %s52, [#allocation8], 128, 128, 8
    $region17: #{tpu_custom_call.1} parent=1 // pred_fallthru
      _
    // Predicated region
    $region18: #{tpu_custom_call.1} parent=1 // pred_check
      _
    $region19: #{tpu_custom_call.1} parent=1 // pred_check_branch
      %59 = sbr.rel (0) target = $region21
    $region20: #{tpu_custom_call.1} parent=1 // pred_region
      %s61 = ssub.s32 128, 128
      %62 = vsyncadd [#allocation8], %s61
      %s64 = sshll.u32 [#allocation9], 4
      %s65 = int_to_ptr.vmem [resolvable:$true] %s64
      %67 = dma.hbm_to_vmem [thread:$0]  %s4, 128, %s65, [#allocation8]
    $region21: #{tpu_custom_call.1} parent=1 // pred_fallthru
      _
    // Predicated region
    $region22: #{tpu_custom_call.1} parent=1 // pred_check
      _
    $region23: #{tpu_custom_call.1} parent=1 // pred_check_branch
      %69 = sbr.rel (0) target = $region25
    $region24: #{tpu_custom_call.1} parent=1 // pred_region
      _
    $region25: #{tpu_custom_call.1} parent=1 // pred_fallthru
      _
    // Predicated region
    $region26: #{tpu_custom_call.1} parent=1 // pred_check
      _
    $region27: #{tpu_custom_call.1} parent=1 // pred_check_branch
      %71 = sbr.rel (0) target = $region29
    $region28: #{tpu_custom_call.1} parent=1 // pred_region
      %72 = dma.done [#allocation3], 128
    $region29: #{tpu_custom_call.1} parent=1 // pred_fallthru
      _
    // Predicated region
    $region30: #{tpu_custom_call.1} parent=1 // pred_check
      _
    $region31: #{tpu_custom_call.1} parent=1 // pred_check_branch
      %74 = sbr.rel (0) target = $region33
    $region32: #{tpu_custom_call.1} parent=1 // pred_region
      %75 = dma.done [#allocation5], 128
    $region33: #{tpu_custom_call.1} parent=1 // pred_fallthru
      _
    // Predicated region
    $region34: #{tpu_custom_call.1} parent=1 // pred_check
      _
    $region35: #{tpu_custom_call.1} parent=1 // pred_check_branch
      %77 = sbr.rel (0) target = $region37
    $region36: #{tpu_custom_call.1} parent=1 // pred_region
      %78 = dma.done [#allocation5], 512
    $region37: #{tpu_custom_call.1} parent=1 // pred_fallthru
      _
    // Predicated region
    $region38: #{tpu_custom_call.1} parent=1 // pred_check
      _
    $region39: #{tpu_custom_call.1} parent=1 // pred_check_branch
      %80 = sbr.rel (0) target = $region41
    $region40: #{tpu_custom_call.1} parent=1 // pred_region
      %81 = dma.done [#allocation8], 4096
    $region41: #{tpu_custom_call.1} parent=1 // pred_fallthru
      _
    // Predicated region
    $region42: #{tpu_custom_call.1} parent=1 // pred_check
      _
    $region43: #{tpu_custom_call.1} parent=1 // pred_check_branch
      %83 = sbr.rel (0) target = $region45
    $region44: #{tpu_custom_call.1} parent=1 // pred_region
      %84 = dma.done [#allocation8], 128
    $region45: #{tpu_custom_call.1} parent=1 // pred_fallthru
      _
    %v85 = vld [vmem:[#allocation2] sm:$0xff]
    %v86 = vld [vmem:[#allocation4] sm:$0xff]
    %v87 = vld [vmem:[%s5] ss:$8 sm:$0x3]
    %s88 = scalar_lea.vmem %s5, 1
    %v89 = vld [vmem:[%s88] ss:$8 sm:$0x3]
    %s90 = scalar_lea.vmem %s5, 2
    %v91 = vld [vmem:[%s90] ss:$8 sm:$0x3]
    %s92 = scalar_lea.vmem %s5, 3
    %v93 = vld [vmem:[%s92] ss:$8 sm:$0x3]
    %s94 = scalar_lea.vmem %s5, 4
    %v95 = vld [vmem:[%s94] ss:$8 sm:$0x3]
    %v96 = vld [vmem:[%s5 + $0x5] ss:$0 sm:$0xff]
    %v97 = vld [vmem:[#allocation6] sm:$0xff]
    %v98 = vld [vmem:[#allocation6 + $0x8] sm:$0xff]
    %v99 = vld [vmem:[#allocation6 + $0x10] sm:$0xff]
    %v100 = vld [vmem:[#allocation6 + $0x18] sm:$0xff]
    %v101 = vunpack.c.l.bf16 %v97
    %v102 = vunpack.c.h.bf16 %v97
    %v103 = vunpack.c.l.bf16 %v98
    %v104 = vunpack.c.h.bf16 %v98
    %v105 = vunpack.c.l.bf16 %v99
    %v106 = vunpack.c.h.bf16 %v99
    %v107 = vunpack.c.l.bf16 %v100
    %v108 = vunpack.c.h.bf16 %v100
    %v110 = vlaneseq
    %v111 = vshrl.u32 %v110, 7
    %v112 = vsub.s32 0, %v111
    %v113 = vrot.slane %v87, %v112
    %v114 = vlaneseq
    %v115 = vshrl.u32 %v114, 7
    %v116 = vsub.s32 1, %v115
    %v117 = vrot.slane %v87, %v116
    %vm120 = vcmask 261120
    %v122 = vsel %vm120, %v85, 0
    %124 = vmatprep.subr.mxu0 %v102
    %125 = vmatpush1.msra.mxu0 %v101
    %126 = vmatprep.subr.mxu0 %v104
    %127 = vmatpush1.msra.mxu0 %v103
    %128 = vmatprep.subr.mxu0 %v106
    %129 = vmatpush1.msra.mxu0 %v105
    %130 = vmatprep.subr.mxu0 %v108
    %131 = vmatpush1.msra.mxu0 %v107
    %132 = vmatprep.subr.mxu0 0.0
    %133 = vmatpush1.msra.mxu0 0.0
    %134 = vmatprep.subr.mxu0 0.0
    %135 = vmatpush1.msra.mxu0 0.0
    %136 = vmatprep.subr.mxu0 0.0
    %137 = vmatpush1.msra.mxu0 0.0
    %138 = vmatprep.subr.mxu0 0.0
    %139 = vmatpush1.msra.mxu0 0.0
    %140 = vmatprep.subr.mxu0 0.0
    %141 = vmatpush1.msra.mxu0 0.0
    %142 = vmatprep.subr.mxu0 0.0
    %143 = vmatpush1.msra.mxu0 0.0
    %144 = vmatprep.subr.mxu0 0.0
    %145 = vmatpush1.msra.mxu0 0.0
    %146 = vmatprep.subr.mxu0 0.0
    %147 = vmatpush1.msra.mxu0 0.0
    %148 = vmatprep.subr.mxu0 0.0
    %149 = vmatpush1.msra.mxu0 0.0
    %150 = vmatprep.subr.mxu0 0.0
    %151 = vmatpush1.msra.mxu0 0.0
    %152 = vmatprep.subr.mxu0 0.0
    %153 = vmatpush1.msra.mxu0 0.0
    %154 = vmatprep.subr.mxu0 0.0
    %155 = vmatpush1.msra.mxu0 0.0
    %156 = vmatprep.subr.mxu0 0.0
    %157 = vmatpush1.msra.mxu0 0.0
    %158 = vmatprep.subr.mxu0 0.0
    %159 = vmatpush1.msra.mxu0 0.0
    %160 = vmatprep.subr.mxu0 0.0
    %161 = vmatpush1.msra.mxu0 0.0
    %162 = vmatprep.subr.mxu0 0.0
    %163 = vmatpush1.msra.mxu0 0.0
    %164 = vmatprep.subr.mxu0 0.0
    %165 = vmatpush1.msra.mxu0 0.0
    %166 = vmatprep.subr.mxu0 0.0
    %167 = vmatpush1.msra.mxu0 0.0
    %168 = vmatprep.subr.mxu0 0.0
    %169 = vmatpush1.msra.mxu0 0.0
    %170 = vmatprep.subr.mxu0 0.0
    %171 = vmatpush1.msra.mxu0 0.0
    %172 = vmatprep.subr.mxu0 0.0
    %173 = vmatpush1.msra.mxu0 0.0
    %174 = vmatprep.subr.mxu0 0.0
    %175 = vmatpush1.msra.mxu0 0.0
    %176 = vmatprep.subr.mxu0 0.0
    %177 = vmatpush1.msra.mxu0 0.0
    %178 = vmatprep.subr.mxu0 0.0
    %179 = vmatpush1.msra.mxu0 0.0
    %180 = vmatprep.subr.mxu0 0.0
    %181 = vmatpush1.msra.mxu0 0.0
    %182 = vmatprep.subr.mxu0 0.0
    %183 = vmatpush1.msra.mxu0 0.0
    %184 = vmatprep.subr.mxu0 0.0
    %185 = vmatpush1.msra.mxu0 0.0
    %186 = vmatprep.subr.mxu0 0.0
    %187 = vmatpush1.msra.mxu0 0.0
    %188 = vmatprep.mubr.f32.mxu0 0.0
    %189 = vmatmul.mubr.f32.gmra.mrb[0].mxu0 %v122
    %v190 = vpop.f32.mrb[0].mxu0
    %v191 = vadd.f32 %v113, %v190
    %v192 = vpop.f32.mrb[0].mxu0
    %v193 = vadd.f32 %v117, %v192
    %194 = vdwg.mxu0
    %v195 = vrot.slane %v191, 4
    %v196 = vadd.f32 %v191, %v195
    %v197 = vrot.slane %v196, 2
    %v198 = vadd.f32 %v196, %v197
    %v199 = vrot.slane %v198, 1
    %v200 = vadd.f32 %v198, %v199
    %v201 = vrot.slane %v193, 4
    %v202 = vadd.f32 %v193, %v201
    %v203 = vrot.slane %v202, 2
    %v204 = vadd.f32 %v202, %v203
    %v205 = vrot.slane %v204, 1
    %v206 = vadd.f32 %v204, %v205
    %v207 = vrcp.pop 8.0
    %v208 = vmul.f32 %v200, %v207
    %v209 = vmul.f32 %v206, %v207
    %v210 = vsub.f32 %v191, %v208
    %v211 = vsub.f32 %v193, %v209
    %v212 = vmul.f32 %v210, %v210
    %v213 = vmul.f32 %v211, %v211
    %v214 = vrot.slane %v212, 4
    %v215 = vadd.f32 %v212, %v214
    %v216 = vrot.slane %v215, 2
    %v217 = vadd.f32 %v215, %v216
    %v218 = vrot.slane %v217, 1
    %v219 = vadd.f32 %v217, %v218
    %v220 = vrot.slane %v213, 4
    %v221 = vadd.f32 %v213, %v220
    %v222 = vrot.slane %v221, 2
    %v223 = vadd.f32 %v221, %v222
    %v224 = vrot.slane %v223, 1
    %v225 = vadd.f32 %v223, %v224
    %v226 = vmul.f32 %v219, %v207
    %v227 = vmul.f32 %v225, %v207
    %v228 = vadd.f32 %v226, 1e-05
    %v229 = vadd.f32 %v227, 1e-05
    %v230 = vrsqrt.pop %v228
    %v231 = vrsqrt.pop %v229
    %v234 = vcombine.low %v230, %v231
    %v236 = vunpack.c.l.s4 1966171168
    %v237 = vunpack.c.0.s8 %v236
    %v238 = vlaneseq
    %v239 = vshrl.u32 %v238, 7
    %v240 = vsub.s32 %v237, %v239
    %v241 = vrot.slane %v234, %v240
    %v243 = vunpack.c.l.s4 1966171168
    %v244 = vunpack.c.0.s8 %v243
    %v245 = vlaneseq
    %v246 = vshrl.u32 %v245, 7
    %v247 = vsub.s32 %v244, %v246
    %v248 = vrot.slane %v241, %v247
    %v250 = vmul.f32 %v89, %v248
    %v252 = vlaneseq
    %v253 = vshrl.u32 %v252, 7
    %v254 = vsub.s32 0, %v253
    %v255 = vrot.slane %v250, %v254
    %v256 = vlaneseq
    %v257 = vshrl.u32 %v256, 7
    %v258 = vsub.s32 1, %v257
    %v259 = vrot.slane %v250, %v258
    %v262 = vmul.f32 %v208, %v255
    %v263 = vmul.f32 %v209, %v259
    %v266 = vcombine.low %v262, %v263
    %v268 = vunpack.c.l.s4 1966171168
    %v269 = vunpack.c.0.s8 %v268
    %v270 = vlaneseq
    %v271 = vshrl.u32 %v270, 7
    %v272 = vsub.s32 %v269, %v271
    %v273 = vrot.slane %v266, %v272
    %v275 = vunpack.c.l.s4 1966171168
    %v276 = vunpack.c.0.s8 %v275
    %v277 = vlaneseq
    %v278 = vshrl.u32 %v277, 7
    %v279 = vsub.s32 %v276, %v278
    %v280 = vrot.slane %v273, %v279
    %v282 = vsub.f32 %v91, %v280
    %v283 = vmul.f32 %v191, %v255
    %v284 = vmul.f32 %v193, %v259
    %v286 = vlaneseq
    %v287 = vshrl.u32 %v286, 7
    %v288 = vsub.s32 0, %v287
    %v289 = vrot.slane %v282, %v288
    %v290 = vlaneseq
    %v291 = vshrl.u32 %v290, 7
    %v292 = vsub.s32 1, %v291
    %v293 = vrot.slane %v282, %v292
    %v296 = vadd.f32 %v283, %v289
    %v297 = vadd.f32 %v284, %v293
    %v298 = vmax.f32 %v296, 0.0
    %v299 = vmax.f32 %v297, 0.0
    %v300 = vld [vmem:[#allocation7] sm:$0xff]
    %v301 = vld [vmem:[#allocation7 + $0x8] sm:$0xff]
    %v302 = vld [vmem:[#allocation7 + $0x10] sm:$0xff]
    %v303 = vld [vmem:[#allocation7 + $0x18] sm:$0xff]
    %v304 = vld [vmem:[#allocation7 + $0x20] sm:$0xff]
    %v305 = vld [vmem:[#allocation7 + $0x28] sm:$0xff]
    %v306 = vld [vmem:[#allocation7 + $0x30] sm:$0xff]
    %v307 = vld [vmem:[#allocation7 + $0x38] sm:$0xff]
    %v308 = vld [vmem:[#allocation7 + $0x40] sm:$0xff]
    %v309 = vld [vmem:[#allocation7 + $0x48] sm:$0xff]
    %v310 = vld [vmem:[#allocation7 + $0x50] sm:$0xff]
    %v311 = vld [vmem:[#allocation7 + $0x58] sm:$0xff]
    %v312 = vld [vmem:[#allocation7 + $0x60] sm:$0xff]
    %v313 = vld [vmem:[#allocation7 + $0x68] sm:$0xff]
    %v314 = vld [vmem:[#allocation7 + $0x70] sm:$0xff]
    %v315 = vld [vmem:[#allocation7 + $0x78] sm:$0xff]
    %v316 = vld [vmem:[#allocation7 + $0x80] sm:$0xff]
    %v317 = vld [vmem:[#allocation7 + $0x88] sm:$0xff]
    %v318 = vld [vmem:[#allocation7 + $0x90] sm:$0xff]
    %v319 = vld [vmem:[#allocation7 + $0x98] sm:$0xff]
    %v320 = vld [vmem:[#allocation7 + $0xa0] sm:$0xff]
    %v321 = vld [vmem:[#allocation7 + $0xa8] sm:$0xff]
    %v322 = vld [vmem:[#allocation7 + $0xb0] sm:$0xff]
    %v323 = vld [vmem:[#allocation7 + $0xb8] sm:$0xff]
    %v324 = vld [vmem:[#allocation7 + $0xc0] sm:$0xff]
    %v325 = vld [vmem:[#allocation7 + $0xc8] sm:$0xff]
    %v326 = vld [vmem:[#allocation7 + $0xd0] sm:$0xff]
    %v327 = vld [vmem:[#allocation7 + $0xd8] sm:$0xff]
    %v328 = vld [vmem:[#allocation7 + $0xe0] sm:$0xff]
    %v329 = vld [vmem:[#allocation7 + $0xe8] sm:$0xff]
    %v330 = vld [vmem:[#allocation7 + $0xf0] sm:$0xff]
    %v331 = vld [vmem:[#allocation7 + $0xf8] sm:$0xff]
    %v332 = vunpack.c.l.bf16 %v300
    %v333 = vunpack.c.h.bf16 %v300
    %v334 = vunpack.c.l.bf16 %v301
    %v335 = vunpack.c.h.bf16 %v301
    %v336 = vunpack.c.l.bf16 %v302
    %v337 = vunpack.c.h.bf16 %v302
    %v338 = vunpack.c.l.bf16 %v303
    %v339 = vunpack.c.h.bf16 %v303
    %v340 = vunpack.c.l.bf16 %v304
    %v341 = vunpack.c.h.bf16 %v304
    %v342 = vunpack.c.l.bf16 %v305
    %v343 = vunpack.c.h.bf16 %v305
    %v344 = vunpack.c.l.bf16 %v306
    %v345 = vunpack.c.h.bf16 %v306
    %v346 = vunpack.c.l.bf16 %v307
    %v347 = vunpack.c.h.bf16 %v307
    %v348 = vunpack.c.l.bf16 %v308
    %v349 = vunpack.c.h.bf16 %v308
    %v350 = vunpack.c.l.bf16 %v309
    %v351 = vunpack.c.h.bf16 %v309
    %v352 = vunpack.c.l.bf16 %v310
    %v353 = vunpack.c.h.bf16 %v310
    %v354 = vunpack.c.l.bf16 %v311
    %v355 = vunpack.c.h.bf16 %v311
    %v356 = vunpack.c.l.bf16 %v312
    %v357 = vunpack.c.h.bf16 %v312
    %v358 = vunpack.c.l.bf16 %v313
    %v359 = vunpack.c.h.bf16 %v313
    %v360 = vunpack.c.l.bf16 %v314
    %v361 = vunpack.c.h.bf16 %v314
    %v362 = vunpack.c.l.bf16 %v315
    %v363 = vunpack.c.h.bf16 %v315
    %v364 = vunpack.c.l.bf16 %v316
    %v365 = vunpack.c.h.bf16 %v316
    %v366 = vunpack.c.l.bf16 %v317
    %v367 = vunpack.c.h.bf16 %v317
    %v368 = vunpack.c.l.bf16 %v318
    %v369 = vunpack.c.h.bf16 %v318
    %v370 = vunpack.c.l.bf16 %v319
    %v371 = vunpack.c.h.bf16 %v319
    %v372 = vunpack.c.l.bf16 %v320
    %v373 = vunpack.c.h.bf16 %v320
    %v374 = vunpack.c.l.bf16 %v321
    %v375 = vunpack.c.h.bf16 %v321
    %v376 = vunpack.c.l.bf16 %v322
    %v377 = vunpack.c.h.bf16 %v322
    %v378 = vunpack.c.l.bf16 %v323
    %v379 = vunpack.c.h.bf16 %v323
    %v380 = vunpack.c.l.bf16 %v324
    %v381 = vunpack.c.h.bf16 %v324
    %v382 = vunpack.c.l.bf16 %v325
    %v383 = vunpack.c.h.bf16 %v325
    %v384 = vunpack.c.l.bf16 %v326
    %v385 = vunpack.c.h.bf16 %v326
    %v386 = vunpack.c.l.bf16 %v327
    %v387 = vunpack.c.h.bf16 %v327
    %v388 = vunpack.c.l.bf16 %v328
    %v389 = vunpack.c.h.bf16 %v328
    %v390 = vunpack.c.l.bf16 %v329
    %v391 = vunpack.c.h.bf16 %v329
    %v392 = vunpack.c.l.bf16 %v330
    %v393 = vunpack.c.h.bf16 %v330
    %v394 = vunpack.c.l.bf16 %v331
    %v395 = vunpack.c.h.bf16 %v331
    %v396 = vld [vmem:[#allocation9] sm:$0xff]
    %v397 = vunpack.c.l.bf16 %v396
    %v398 = vunpack.c.h.bf16 %v396
    %vm399 = vcmask 64512
    %v401 = vsel %vm399, %v86, 0
    %403 = vmatprep.subr.mxu0 %v398
    %404 = vmatpush1.msra.mxu0 %v397
    %405 = vmatprep.subr.mxu0 0.0
    %406 = vmatpush1.msra.mxu0 0.0
    %407 = vmatprep.subr.mxu0 0.0
    %408 = vmatpush1.msra.mxu0 0.0
    %409 = vmatprep.subr.mxu0 0.0
    %410 = vmatpush1.msra.mxu0 0.0
    %411 = vmatprep.subr.mxu0 0.0
    %412 = vmatpush1.msra.mxu0 0.0
    %413 = vmatprep.subr.mxu0 0.0
    %414 = vmatpush1.msra.mxu0 0.0
    %415 = vmatprep.subr.mxu0 0.0
    %416 = vmatpush1.msra.mxu0 0.0
    %417 = vmatprep.subr.mxu0 0.0
    %418 = vmatpush1.msra.mxu0 0.0
    %419 = vmatprep.subr.mxu0 0.0
    %420 = vmatpush1.msra.mxu0 0.0
    %421 = vmatprep.subr.mxu0 0.0
    %422 = vmatpush1.msra.mxu0 0.0
    %423 = vmatprep.subr.mxu0 0.0
    %424 = vmatpush1.msra.mxu0 0.0
    %425 = vmatprep.subr.mxu0 0.0
    %426 = vmatpush1.msra.mxu0 0.0
    %427 = vmatprep.subr.mxu0 0.0
    %428 = vmatpush1.msra.mxu0 0.0
    %429 = vmatprep.subr.mxu0 0.0
    %430 = vmatpush1.msra.mxu0 0.0
    %431 = vmatprep.subr.mxu0 0.0
    %432 = vmatpush1.msra.mxu0 0.0
    %433 = vmatprep.subr.mxu0 0.0
    %434 = vmatpush1.msra.mxu0 0.0
    %435 = vmatprep.subr.mxu0 0.0
    %436 = vmatpush1.msra.mxu0 0.0
    %437 = vmatprep.subr.mxu0 0.0
    %438 = vmatpush1.msra.mxu0 0.0
    %439 = vmatprep.subr.mxu0 0.0
    %440 = vmatpush1.msra.mxu0 0.0
    %441 = vmatprep.subr.mxu0 0.0
    %442 = vmatpush1.msra.mxu0 0.0
    %443 = vmatprep.subr.mxu0 0.0
    %444 = vmatpush1.msra.mxu0 0.0
    %445 = vmatprep.subr.mxu0 0.0
    %446 = vmatpush1.msra.mxu0 0.0
    %447 = vmatprep.subr.mxu0 0.0
    %448 = vmatpush1.msra.mxu0 0.0
    %449 = vmatprep.subr.mxu0 0.0
    %450 = vmatpush1.msra.mxu0 0.0
    %451 = vmatprep.subr.mxu0 0.0
    %452 = vmatpush1.msra.mxu0 0.0
    %453 = vmatprep.subr.mxu0 0.0
    %454 = vmatpush1.msra.mxu0 0.0
    %455 = vmatprep.subr.mxu0 0.0
    %456 = vmatpush1.msra.mxu0 0.0
    %457 = vmatprep.subr.mxu0 0.0
    %458 = vmatpush1.msra.mxu0 0.0
    %459 = vmatprep.subr.mxu0 0.0
    %460 = vmatpush1.msra.mxu0 0.0
    %461 = vmatprep.subr.mxu0 0.0
    %462 = vmatpush1.msra.mxu0 0.0
    %463 = vmatprep.subr.mxu0 0.0
    %464 = vmatpush1.msra.mxu0 0.0
    %465 = vmatprep.subr.mxu0 0.0
    %466 = vmatpush1.msra.mxu0 0.0
    %467 = vmatprep.mubr.f32.mxu0 0.0
    %468 = vmatmul.mubr.f32.gmra.mrb[0].mxu0 %v401
    %v469 = vpop.f32.mrb[0].mxu0
    %v470 = vadd.f32 0.0, %v469
    %v471 = vpop.f32.mrb[0].mxu0
    %v472 = vadd.f32 0.0, %v471
    %473 = vdwg.mxu0
    %474 = vmatprep.subr.mxu0 %v333
    %475 = vmatpush1.msra.mxu0 %v332
    %476 = vmatprep.subr.mxu0 %v335
    %477 = vmatpush1.msra.mxu0 %v334
    %478 = vmatprep.subr.mxu0 %v337
    %479 = vmatpush1.msra.mxu0 %v336
    %480 = vmatprep.subr.mxu0 %v339
    %481 = vmatpush1.msra.mxu0 %v338
    %482 = vmatprep.subr.mxu0 %v341
    %483 = vmatpush1.msra.mxu0 %v340
    %484 = vmatprep.subr.mxu0 %v343
    %485 = vmatpush1.msra.mxu0 %v342
    %486 = vmatprep.subr.mxu0 %v345
    %487 = vmatpush1.msra.mxu0 %v344
    %488 = vmatprep.subr.mxu0 %v347
    %489 = vmatpush1.msra.mxu0 %v346
    %490 = vmatprep.subr.mxu0 %v349
    %491 = vmatpush1.msra.mxu0 %v348
    %492 = vmatprep.subr.mxu0 %v351
    %493 = vmatpush1.msra.mxu0 %v350
    %494 = vmatprep.subr.mxu0 %v353
    %495 = vmatpush1.msra.mxu0 %v352
    %496 = vmatprep.subr.mxu0 %v355
    %497 = vmatpush1.msra.mxu0 %v354
    %498 = vmatprep.subr.mxu0 %v357
    %499 = vmatpush1.msra.mxu0 %v356
    %500 = vmatprep.subr.mxu0 %v359
    %501 = vmatpush1.msra.mxu0 %v358
    %502 = vmatprep.subr.mxu0 %v361
    %503 = vmatpush1.msra.mxu0 %v360
    %504 = vmatprep.subr.mxu0 %v363
    %505 = vmatpush1.msra.mxu0 %v362
    %506 = vmatprep.subr.mxu0 %v365
    %507 = vmatpush1.msra.mxu0 %v364
    %508 = vmatprep.subr.mxu0 %v367
    %509 = vmatpush1.msra.mxu0 %v366
    %510 = vmatprep.subr.mxu0 %v369
    %511 = vmatpush1.msra.mxu0 %v368
    %512 = vmatprep.subr.mxu0 %v371
    %513 = vmatpush1.msra.mxu0 %v370
    %514 = vmatprep.subr.mxu0 %v373
    %515 = vmatpush1.msra.mxu0 %v372
    %516 = vmatprep.subr.mxu0 %v375
    %517 = vmatpush1.msra.mxu0 %v374
    %518 = vmatprep.subr.mxu0 %v377
    %519 = vmatpush1.msra.mxu0 %v376
    %520 = vmatprep.subr.mxu0 %v379
    %521 = vmatpush1.msra.mxu0 %v378
    %522 = vmatprep.subr.mxu0 %v381
    %523 = vmatpush1.msra.mxu0 %v380
    %524 = vmatprep.subr.mxu0 %v383
    %525 = vmatpush1.msra.mxu0 %v382
    %526 = vmatprep.subr.mxu0 %v385
    %527 = vmatpush1.msra.mxu0 %v384
    %528 = vmatprep.subr.mxu0 %v387
    %529 = vmatpush1.msra.mxu0 %v386
    %530 = vmatprep.subr.mxu0 %v389
    %531 = vmatpush1.msra.mxu0 %v388
    %532 = vmatprep.subr.mxu0 %v391
    %533 = vmatpush1.msra.mxu0 %v390
    %534 = vmatprep.subr.mxu0 %v393
    %535 = vmatpush1.msra.mxu0 %v392
    %536 = vmatprep.subr.mxu0 %v395
    %537 = vmatpush1.msra.mxu0 %v394
    %538 = vmatprep.mubr.f32.mxu0 %v299
    %539 = vmatmul.mubr.f32.gmra.mrb[0].mxu0 %v298
    %v540 = vpop.f32.mrb[0].mxu0
    %v541 = vadd.f32 %v470, %v540
    %v542 = vpop.f32.mrb[0].mxu0
    %v543 = vadd.f32 %v472, %v542
    %544 = vdwg.mxu0
    %v546 = vlaneseq
    %v547 = vshrl.u32 %v546, 7
    %v548 = vsub.s32 0, %v547
    %v549 = vrot.slane %v93, %v548
    %v550 = vlaneseq
    %v551 = vshrl.u32 %v550, 7
    %v552 = vsub.s32 1, %v551
    %v553 = vrot.slane %v93, %v552
    %v556 = vadd.f32 %v541, %v549
    %v557 = vadd.f32 %v543, %v553
    %v558 = vmax.f32 %v556, 0.0
    %v559 = vmax.f32 %v557, 0.0
    %v561 = vlaneseq
    %v562 = vshrl.u32 %v561, 7
    %v563 = vsub.s32 0, %v562
    %v564 = vrot.slane %v95, %v563
    %v565 = vlaneseq
    %v566 = vshrl.u32 %v565, 7
    %v567 = vsub.s32 1, %v566
    %v568 = vrot.slane %v95, %v567
    %v571 = vmul.f32 %v558, %v564
    %v572 = vmul.f32 %v559, %v568
    %v573 = vadd.f32 %v571, %v572
    %574 = vadd.xlane.f32.xlu0 %v573
    %v575 = vpop.xlane.xlu0 %574
    %v576 = vadd.f32 %v575, %v96
    %vm577 = vcmask 7168
    %578 = vst.msk [vmem:[%s6] sm:$0xff] %vm577, %v576
    // Predicated region
    $region46: #{tpu_custom_call.1} parent=1 // pred_check
      _
    $region47: #{tpu_custom_call.1} parent=1 // pred_check_branch
      %580 = sbr.rel (0) target = $region49
    $region48: #{tpu_custom_call.1} parent=1 // pred_region
      _
    $region49: #{tpu_custom_call.1} parent=1 // pred_fallthru
      _
    // Predicated region
    $region50: #{tpu_custom_call.1} parent=1 // pred_check
      _
    $region51: #{tpu_custom_call.1} parent=1 // pred_check_branch
      %582 = sbr.rel (0) target = $region53
    $region52: #{tpu_custom_call.1} parent=1 // pred_region
      _
    $region53: #{tpu_custom_call.1} parent=1 // pred_fallthru
      _
    %583 = vsyncpa [#allocation3], 1
    %584 = vsyncpa [#allocation5], 1
    %585 = vsyncpa [#allocation8], 1

</llo_original>
